<compile_context>
chip_gen: v7x
topology: tpu7x:2x2x1
jax: 0.10.0
libtpu: 0.0.40
codegen_flags: <defaults>
</compile_context>

<pallas_src>
import jax
import jax.numpy as jnp
from jax.experimental import pallas as pl
from jax.experimental.pallas import tpu as pltpu


_LANE = 128
_SUBLANE = 8
_MAX_TILE_ROWS = 2048  # 2048*128*4B = 1 MiB per f32 block; ~4 MiB double-buffered


def _round_up(n, m):
    return ((n + m - 1) // m) * m


def _identity_kernel(x_ref, o_ref):
    # Whole-tile, lane-dense VMEM copy (unmasked vst: last dim is 128).
    o_ref[...] = x_ref[...]


@jax.jit
def pallas_identity_copy(x: jax.Array) -> jax.Array:
    """Materialized copy of x via a lane-dense, row-tiled Pallas kernel."""
    orig_shape = x.shape
    n = x.size

    # Minimum sublane tile depends on dtype packing (f32->8, bf16->16, i8->32).
    packing = max(1, 4 // jnp.dtype(x.dtype).itemsize)
    min_rows = _SUBLANE * packing

    # Lane-dense layout: present the kernel a (rows, 128) slab.
    rows = -(-n // _LANE)                      # ceil-div
    rows = _round_up(rows, min_rows)
    tile_rows = min(_MAX_TILE_ROWS, rows)      # both are multiples of min_rows
    rows = _round_up(rows, tile_rows)
    padded_n = rows * _LANE

    flat = jnp.ravel(x)
    if padded_n != n:
        flat = jnp.pad(flat, (0, padded_n - n))
    slab = flat.reshape(rows, _LANE)

    out = pl.pallas_call(
        _identity_kernel,
        out_shape=jax.ShapeDtypeStruct((rows, _LANE), slab.dtype),
        grid_spec=pltpu.PrefetchScalarGridSpec(
            num_scalar_prefetch=0,
            grid=(rows // tile_rows,),
            in_specs=[pl.BlockSpec((tile_rows, _LANE), lambda i: (i, 0))],
            out_specs=pl.BlockSpec((tile_rows, _LANE), lambda i: (i, 0)),
        ),
        # Identity copy: alias output onto the (fresh, padded) input slab so
        # no second HBM buffer / writeback is materialized.
        input_output_aliases={0: 0},
        compiler_params=pltpu.CompilerParams(
            # Row tiles are independent -> shard across v7x's 2 TCs.
            dimension_semantics=("parallel",),
        ),
    )(slab)

    return out.reshape(-1)[:n].reshape(orig_shape)


class ModelBase:
    """JAX/Pallas port of neusight's ModelBase (abstract predictor base)."""

    def __init__(self, config, tag=None):
        self.config = config
        self.name = config["name"]
        if tag is not None:
            self.name = self.name + "-" + tag
        self.features = config["features"]
        # Base class declares no parameters.
        self.params = {}

    # --- forward: faithful to the PyTorch spec (abstract) ------------------
    def forward(self, x):
        # TODO(synk): abstract in the PyTorch source; concrete subclasses
        # implement the actual MLP prediction.
        raise NotImplementedError

    def __call__(self, x):
        return self.forward(x)

    # --- data path actually defined by the base class ----------------------
    def set_record(self, x):
        # Pure pass-through. Per the performance review, NO pallas_call here:
        # returning x directly is a 100% win (no HBM read/write, no launch).
        return x

    def record_copy(self, x):
        # Optional: an explicitly materialized copy of the record, done with
        # the optimized lane-dense / row-tiled / aliased Pallas kernel.
        return pallas_identity_copy(x)

    # --- non-compute methods mirrored from the PyTorch module --------------
    def stats(self):
        return {}

    def dump(self, dataset_name):
        pass

    def set_meta_table(self, table_path):
        pass

    # TODO(synk): save_state / load_state are checkpoint file I/O; not ported
    # (no file I/O allowed in this self-contained kernel script).


if __name__ == "__main__":
    key = jax.random.PRNGKey(0)
    k1, k2 = jax.random.split(key)

    num_features = 32
    batch = 8
    config = {
        "name": "basemodel",
        "features": [f"feat_{i}" for i in range(num_features)],
    }
    model = ModelBase(config, tag="pallas")

    # Small feature-vector batch (the shape neusight predictors consume).
    x = jax.random.normal(k1, (batch, num_features), dtype=jnp.float32)

    # 1) forward is abstract -- must raise, exactly like the PyTorch base.
    raised = False
    try:
        model(x)
    except NotImplementedError:
        raised = True
    assert raised, "forward() should raise NotImplementedError on the base class"

    # 2) set_record is a zero-cost pass-through (no kernel launched).
    assert model.set_record(x) is x

    # 3) Materialized copy through the optimized Pallas kernel (single tile,
    #    lane-dense padded slab).
    y = model.record_copy(x)
    y = jax.block_until_ready(y)
    assert y.shape == x.shape and y.dtype == x.dtype
    assert bool(jnp.allclose(y, x))

    # 4) Larger input that exercises padding + a multi-tile "parallel" grid.
    x_big = jax.random.normal(k2, (4100, 96), dtype=jnp.float32)
    y_big = jax.block_until_ready(pallas_identity_copy(x_big))
    assert y_big.shape == x_big.shape and y_big.dtype == x_big.dtype
    assert bool(jnp.allclose(y_big, x_big))

    print("KERNEL_OK")
</pallas_src>

<mosaic_0001>
module attributes {stable_mosaic.version = 11 : i64} {
  func.func @_identity_kernel(%arg0: i32, %arg1: memref<8x128xf32, #tpu.memory_space<vmem>>, %arg2: memref<8x128xf32, #tpu.memory_space<vmem>>) attributes {dimension_semantics = [#tpu.dimension_semantics<parallel>], iteration_bounds = array<i64: 1>, scalar_prefetch = 0 : i64, scratch_operands = 0 : i64, tpu.core_type = #tpu.core_type<tc>, window_params = [{transform_indices = @transform_0, window_bounds = array<i64: 8, 128>}, {transform_indices = @transform_1, window_bounds = array<i64: 8, 128>}]} {
    %c0 = arith.constant 0 : index
    %c0_0 = arith.constant 0 : index
    %0 = vector.load %arg1[%c0, %c0_0] : memref<8x128xf32, #tpu.memory_space<vmem>>, vector<8x128xf32>
    %c0_1 = arith.constant 0 : index
    %c0_2 = arith.constant 0 : index
    %1 = vector.load %arg2[%c0_1, %c0_2] : memref<8x128xf32, #tpu.memory_space<vmem>>, vector<8x128xf32>
    tpu.vector_store %arg2[%c0_1, %c0_2], %0 {strides = array<i32>} : memref<8x128xf32, #tpu.memory_space<vmem>>, vector<8x128xf32>,
    return
  }
  func.func @transform_0(%arg0: i32) -> (i32, i32) {
    %c0_i32 = arith.constant 0 : i32
    %c0_i32_0 = arith.constant 0 : i32
    return %arg0, %c0_i32 : i32, i32
  }
  func.func @transform_1(%arg0: i32) -> (i32, i32) {
    %c0_i32 = arith.constant 0 : i32
    %c0_i32_0 = arith.constant 0 : i32
    return %arg0, %c0_i32 : i32, i32
  }
}

</mosaic_0001>

<llo_original>
// kernel: pallas_identity_copy.1
$region0: #{pallas_identity_copy.1}
  #allocation0 [shape = 'u32[]', space=smem, size = 0x4, offset = 0x4, fixed_abs, tag = 'smem constant byte address 0x4 - core index']
  #allocation1 [shape = 'u32[144,128]{1,0:T(1,128)}', space=vmem, size = 0x12000, scoped, tag = 'internal scratch']
  %s0 = inlined_call_operand.vmem [shape: f32[8,128], index: 0, kind: input, shape index: {}, may-alias: {0,1}]
  %s1 = inlined_call_operand.vmem [shape: f32[8,128], index: 1, kind: output, shape index: {}, may-alias: {0,1}]
  %s2 = sld [smem:[#allocation0]]
  $region14: #{pallas_identity_copy.1} parent=0
    _
  %s4 = ssub.s32 1, %s2
  %s5 = scalar_select 0, %s4, %s2
  // Predicated region
  $region2: #{pallas_identity_copy.1} parent=0 // pred_check
    _
  $region3: #{pallas_identity_copy.1} parent=0 // pred_check_branch
    %7 = sbr.rel (0) target = $region5
  $region4: #{pallas_identity_copy.1} parent=0 // pred_region
    _
  $region5: #{pallas_identity_copy.1} parent=0 // pred_fallthru
    _
  %v8 = vld [vmem:[%s0] sm:$0xff]
  %9 = vst [vmem:[%s1] sm:$0xff] %v8
  // Predicated region
  $region6: #{pallas_identity_copy.1} parent=0 // pred_check
    _
  $region7: #{pallas_identity_copy.1} parent=0 // pred_check_branch
    %11 = sbr.rel (0) target = $region9
  $region8: #{pallas_identity_copy.1} parent=0 // pred_region
    _
  $region9: #{pallas_identity_copy.1} parent=0 // pred_fallthru
    _
  // Predicated region
  $region10: #{pallas_identity_copy.1} parent=0 // pred_check
    _
  $region11: #{pallas_identity_copy.1} parent=0 // pred_check_branch
    %13 = sbr.rel (0) target = $region13
  $region12: #{pallas_identity_copy.1} parent=0 // pred_region
    _
  $region13: #{pallas_identity_copy.1} parent=0 // pred_fallthru
    _

</llo_original>
